<compile_context>
chip_gen: v6e
topology: v6e:2x2x1
jax: 0.10.0
libtpu: 0.0.40
codegen_flags: <defaults>
</compile_context>

<pallas_src>
import functools

import jax
import jax.numpy as jnp
from jax.experimental import pallas as pl
from jax.experimental.pallas import tpu as pltpu


def _round_up(n, m):
    return (n + m - 1) // m * m


def _ffn_kernel(x_ref, w1_ref, b1_ref, w2_ref, b2_ref, o_ref):
    # x_ref: (tm, Ep) bf16, w1_ref: (Ep, Hp) bf16, b1_ref: (1, Hp) f32,
    # w2_ref: (Hp, Ep) bf16, b2_ref: (1, Ep) f32, o_ref: (tm, Ep) out dtype.
    x = x_ref[...]
    # First matmul on the MXU, f32 accumulation; bias add in f32.
    h = jnp.dot(x, w1_ref[...], preferred_element_type=jnp.float32)
    h = h + b1_ref[...]
    # GELU (tanh approximation, GPT-style custom GELU) in f32 on VPU/EUP.
    c = 0.7978845608028654  # sqrt(2/pi)
    g = 0.5 * h * (1.0 + jnp.tanh(c * (h + 0.044715 * h * h * h)))
    # Second matmul: cast activations down to the weight dtype for the MXU.
    out = jnp.dot(g.astype(w2_ref.dtype), w2_ref[...],
                  preferred_element_type=jnp.float32)
    out = out + b2_ref[...]
    o_ref[...] = out.astype(o_ref.dtype)


def _vmem_limit_bytes(tm, Ep, Hp, compute_itemsize):
    # Double-buffered weights + biases + double-buffered x/out tiles +
    # rough intermediate (tm, Hp) f32 working set, with 2x headroom.
    weights = 2 * 2 * Ep * Hp * compute_itemsize          # W1, W2 (x2 buffers)
    biases = 2 * 2 * (Hp + Ep) * 4
    io_tiles = 2 * tm * Ep * compute_itemsize + 2 * tm * Ep * 4
    interm = 2 * tm * Hp * 4
    need = 2 * (weights + biases + io_tiles + interm)
    return int(min(max(need, 32 << 20), 96 << 20))


@functools.partial(jax.jit, static_argnames=("tm", "compute_dtype"))
def _feed_forward_2d(x2d, w1, b1, w2, b2, *, tm, compute_dtype):
    M, E = x2d.shape
    H = w1.shape[1]

    Mp = _round_up(M, tm)
    Ep = _round_up(E, 128)   # lane-dense output / input last dim
    Hp = _round_up(H, 128)   # lane-dense hidden dim

    cdt = jnp.dtype(compute_dtype)
    xw = jnp.pad(x2d, ((0, Mp - M), (0, Ep - E))).astype(cdt)
    w1p = jnp.pad(w1, ((0, Ep - E), (0, Hp - H))).astype(cdt)
    w2p = jnp.pad(w2, ((0, Hp - H), (0, Ep - E))).astype(cdt)
    b1p = jnp.pad(b1.astype(jnp.float32), ((0, 0), (0, Hp - H)))
    b2p = jnp.pad(b2.astype(jnp.float32), ((0, 0), (0, Ep - E)))

    out = pl.pallas_call(
        _ffn_kernel,
        out_shape=jax.ShapeDtypeStruct((Mp, Ep), x2d.dtype),
        grid_spec=pl.GridSpec(
            grid=(Mp // tm,),
            in_specs=[
                pl.BlockSpec((tm, Ep), lambda i: (i, 0)),   # x row tile
                pl.BlockSpec((Ep, Hp), lambda i: (0, 0)),   # W1 (resident)
                pl.BlockSpec((1, Hp), lambda i: (0, 0)),    # b1
                pl.BlockSpec((Hp, Ep), lambda i: (0, 0)),   # W2 (resident)
                pl.BlockSpec((1, Ep), lambda i: (0, 0)),    # b2
            ],
            out_specs=pl.BlockSpec((tm, Ep), lambda i: (i, 0)),
        ),
        compiler_params=pltpu.CompilerParams(
            dimension_semantics=("parallel",),
            vmem_limit_bytes=_vmem_limit_bytes(tm, Ep, Hp, cdt.itemsize),
        ),
    )(xw, w1p, b1p, w2p, b2p)
    return out[:M, :E]


def feed_forward(x, w1, b1, w2, b2, *, embedding_size, tm=256,
                 compute_dtype=jnp.bfloat16):
    """FeedForward forward pass: x @ W1 + b1 -> GELU -> @ W2 + b2.

    Weights are in kernel layout (in, out): w1 (E, H), w2 (H, E);
    biases are (1, H) / (1, E). Matches PyTorch
    nn.Linear(E,H) -> GELU -> nn.Linear(H,E) forward semantics.
    """
    if x.shape[-1] != embedding_size:
        raise ValueError(
            f"Input shape {x.shape} does not match expected shape "
            f"(..., {embedding_size})")
    lead = x.shape[:-1]
    E = embedding_size
    x2d = x.reshape(-1, E)
    M = x2d.shape[0]
    # Don't use a row tile bigger than the (8-aligned) row count.
    tm_eff = max(8, min(tm, _round_up(M, 8)))
    out2d = _feed_forward_2d(x2d, w1, b1, w2, b2,
                             tm=tm_eff, compute_dtype=compute_dtype)
    return out2d.reshape(*lead, E)


def init_params(key, embedding_size, hidden_size, dtype=jnp.float32):
    # Deterministic init mimicking nn.Linear (weight layout (out, in)),
    # then transposed to kernel layout (in, out) so the kernel does x @ W.
    k1, k2, k3, k4 = jax.random.split(key, 4)
    bound1 = 1.0 / (embedding_size ** 0.5)
    bound2 = 1.0 / (hidden_size ** 0.5)
    w1_t = jax.random.uniform(k1, (hidden_size, embedding_size), dtype,
                              -bound1, bound1)
    b1 = jax.random.uniform(k2, (1, hidden_size), dtype, -bound1, bound1)
    w2_t = jax.random.uniform(k3, (embedding_size, hidden_size), dtype,
                              -bound2, bound2)
    b2 = jax.random.uniform(k4, (1, embedding_size), dtype, -bound2, bound2)
    return w1_t.T, b1, w2_t.T, b2   # kernel layout: (in, out)


def _reference(x, w1, b1, w2, b2):
    h = x @ w1 + b1
    c = 0.7978845608028654
    g = 0.5 * h * (1.0 + jnp.tanh(c * (h + 0.044715 * h ** 3)))
    return g @ w2 + b2


if __name__ == "__main__":
    EMBED, HIDDEN = 32, 64
    BATCH, SEQ = 2, 8

    key = jax.random.PRNGKey(0)
    kx, kp = jax.random.split(key)
    x = jax.random.normal(kx, (BATCH, SEQ, EMBED), jnp.float32)
    w1, b1, w2, b2 = init_params(kp, EMBED, HIDDEN)

    out = feed_forward(x, w1, b1, w2, b2, embedding_size=EMBED)
    out = jax.block_until_ready(out)

    ref = _reference(x.reshape(-1, EMBED), w1, b1, w2, b2).reshape(x.shape)
    assert out.shape == x.shape
    # bf16 MXU operands (f32 accumulation) -> looser tolerance vs f32 reference.
    assert jnp.allclose(out, ref, atol=2e-2, rtol=2e-2), "mismatch vs reference"
    print("KERNEL_OK")
</pallas_src>

<mosaic_0001>
module attributes {stable_mosaic.version = 11 : i64} {
  func.func @_ffn_kernel(%arg0: i32, %arg1: memref<16x128xbf16, #tpu.memory_space<vmem>>, %arg2: memref<128x128xbf16, #tpu.memory_space<vmem>>, %arg3: memref<1x128xf32, #tpu.memory_space<vmem>>, %arg4: memref<128x128xbf16, #tpu.memory_space<vmem>>, %arg5: memref<1x128xf32, #tpu.memory_space<vmem>>, %arg6: memref<16x128xf32, #tpu.memory_space<vmem>>) attributes {dimension_semantics = [#tpu.dimension_semantics<parallel>], iteration_bounds = array<i64: 1>, scalar_prefetch = 0 : i64, scratch_operands = 0 : i64, tpu.core_type = #tpu.core_type<tc>, window_params = [{transform_indices = @transform_0, window_bounds = array<i64: 16, 128>}, {pipeline_mode = #tpu.pipeline_mode<synchronous>, transform_indices = @transform_1, window_bounds = array<i64: 128, 128>}, {pipeline_mode = #tpu.pipeline_mode<synchronous>, transform_indices = @transform_2, window_bounds = array<i64: 1, 128>}, {pipeline_mode = #tpu.pipeline_mode<synchronous>, transform_indices = @transform_3, window_bounds = array<i64: 128, 128>}, {pipeline_mode = #tpu.pipeline_mode<synchronous>, transform_indices = @transform_4, window_bounds = array<i64: 1, 128>}, {transform_indices = @transform_5, window_bounds = array<i64: 16, 128>}]} {
    %c0 = arith.constant 0 : index
    %c0_0 = arith.constant 0 : index
    %0 = vector.load %arg1[%c0, %c0_0] : memref<16x128xbf16, #tpu.memory_space<vmem>>, vector<16x128xbf16>
    %c0_1 = arith.constant 0 : index
    %c0_2 = arith.constant 0 : index
    %1 = vector.load %arg2[%c0_1, %c0_2] : memref<128x128xbf16, #tpu.memory_space<vmem>>, vector<128x128xbf16>
    %cst = arith.constant dense<0.000000e+00> : vector<16x128xf32>
    %2 = tpu.matmul %0, %1, %cst {dimension_numbers = #tpu.dot_dimension_numbers<[1], [0], [0], [1], [0, 0, 1, 1], [], []>} : vector<16x128xbf16>, vector<128x128xbf16>, vector<16x128xf32> -> vector<16x128xf32>
    %c0_3 = arith.constant 0 : index
    %c0_4 = arith.constant 0 : index
    %3 = vector.load %arg3[%c0_3, %c0_4] : memref<1x128xf32, #tpu.memory_space<vmem>>, vector<1x128xf32>
    %4 = vector.broadcast %3 : vector<1x128xf32> to vector<16x128xf32>
    %5 = arith.addf %2, %4 : vector<16x128xf32>
    %cst_5 = arith.constant 5.000000e-01 : f32
    %6 = vector.broadcast %cst_5 : f32 to vector<16x128xf32>
    %7 = arith.mulf %6, %5 : vector<16x128xf32>
    %cst_6 = arith.constant 4.471500e-02 : f32
    %8 = vector.broadcast %cst_6 : f32 to vector<16x128xf32>
    %9 = arith.mulf %8, %5 : vector<16x128xf32>
    %10 = arith.mulf %9, %5 : vector<16x128xf32>
    %11 = arith.mulf %10, %5 : vector<16x128xf32>
    %12 = arith.addf %5, %11 : vector<16x128xf32>
    %cst_7 = arith.constant 0.797884583 : f32
    %13 = vector.broadcast %cst_7 : f32 to vector<16x128xf32>
    %14 = arith.mulf %13, %12 : vector<16x128xf32>
    %15 = math.tanh %14 : vector<16x128xf32>
    %cst_8 = arith.constant 1.000000e+00 : f32
    %16 = vector.broadcast %cst_8 : f32 to vector<16x128xf32>
    %17 = arith.addf %16, %15 : vector<16x128xf32>
    %18 = arith.mulf %7, %17 : vector<16x128xf32>
    %19 = arith.truncf %18 : vector<16x128xf32> to vector<16x128xbf16>
    %c0_9 = arith.constant 0 : index
    %c0_10 = arith.constant 0 : index
    %20 = vector.load %arg4[%c0_9, %c0_10] : memref<128x128xbf16, #tpu.memory_space<vmem>>, vector<128x128xbf16>
    %cst_11 = arith.constant dense<0.000000e+00> : vector<16x128xf32>
    %21 = tpu.matmul %19, %20, %cst_11 {dimension_numbers = #tpu.dot_dimension_numbers<[1], [0], [0], [1], [0, 0, 1, 1], [], []>} : vector<16x128xbf16>, vector<128x128xbf16>, vector<16x128xf32> -> vector<16x128xf32>
    %c0_12 = arith.constant 0 : index
    %c0_13 = arith.constant 0 : index
    %22 = vector.load %arg5[%c0_12, %c0_13] : memref<1x128xf32, #tpu.memory_space<vmem>>, vector<1x128xf32>
    %23 = vector.broadcast %22 : vector<1x128xf32> to vector<16x128xf32>
    %24 = arith.addf %21, %23 : vector<16x128xf32>
    %c0_14 = arith.constant 0 : index
    %c0_15 = arith.constant 0 : index
    %25 = vector.load %arg6[%c0_14, %c0_15] : memref<16x128xf32, #tpu.memory_space<vmem>>, vector<16x128xf32>
    tpu.vector_store %arg6[%c0_14, %c0_15], %24 {strides = array<i32>} : memref<16x128xf32, #tpu.memory_space<vmem>>, vector<16x128xf32>,
    return
  }
  func.func @transform_0(%arg0: i32) -> (i32, i32) {
    %c0_i32 = arith.constant 0 : i32
    %c0_i32_0 = arith.constant 0 : i32
    return %arg0, %c0_i32 : i32, i32
  }
  func.func @transform_1(%arg0: i32) -> (i32, i32) {
    %c0_i32 = arith.constant 0 : i32
    %c0_i32_0 = arith.constant 0 : i32
    %c0_i32_1 = arith.constant 0 : i32
    return %c0_i32, %c0_i32_0 : i32, i32
  }
  func.func @transform_2(%arg0: i32) -> (i32, i32) {
    %c0_i32 = arith.constant 0 : i32
    %c0_i32_0 = arith.constant 0 : i32
    %c0_i32_1 = arith.constant 0 : i32
    return %c0_i32, %c0_i32_0 : i32, i32
  }
  func.func @transform_3(%arg0: i32) -> (i32, i32) {
    %c0_i32 = arith.constant 0 : i32
    %c0_i32_0 = arith.constant 0 : i32
    %c0_i32_1 = arith.constant 0 : i32
    return %c0_i32, %c0_i32_0 : i32, i32
  }
  func.func @transform_4(%arg0: i32) -> (i32, i32) {
    %c0_i32 = arith.constant 0 : i32
    %c0_i32_0 = arith.constant 0 : i32
    %c0_i32_1 = arith.constant 0 : i32
    return %c0_i32, %c0_i32_0 : i32, i32
  }
  func.func @transform_5(%arg0: i32) -> (i32, i32) {
    %c0_i32 = arith.constant 0 : i32
    %c0_i32_0 = arith.constant 0 : i32
    return %arg0, %c0_i32 : i32, i32
  }
}

</mosaic_0001>

<llo_original>
// kernel: _feed_forward_2d.1
$region0: #{_feed_forward_2d.1}
  #allocation0 [shape = 'u32[]', space=smem, size = 0x4, offset = 0x4, fixed_abs, tag = 'smem constant byte address 0x4 - core index']
  #allocation1 [shape = 'u32[144,128]{1,0:T(1,128)}', space=vmem, size = 0x12000, scoped, tag = 'internal scratch']
  %s0 = inlined_call_operand.vmem [shape: bf16[16,128], index: 0, kind: input, shape index: {}]
  %s1 = inlined_call_operand.vmem [shape: bf16[128,128], index: 1, kind: input, shape index: {}]
  %s2 = inlined_call_operand.vmem [shape: f32[1,128], index: 2, kind: input, shape index: {}]
  %s3 = inlined_call_operand.vmem [shape: bf16[128,128], index: 3, kind: input, shape index: {}]
  %s4 = inlined_call_operand.vmem [shape: f32[1,128], index: 4, kind: input, shape index: {}]
  %s5 = inlined_call_operand.hbm [shape: f32[16,128], index: 5, kind: output, shape index: {}]
  %s6 = sld [smem:[#allocation0]]
  $region30: #{_feed_forward_2d.1} parent=0
    _
  %s8 = ssub.s32 1, %s6
  %s9 = scalar_select 0, %s8, %s6
  $region1: #{_feed_forward_2d.1} parent=0
    #allocation2 [shape = 'u8[8192]{0}', space=vmem, size = 0x2000, scoped, tag = 'output window, operand 0, single buffered']
    #allocation3 [shape = 's32[1]{0}', space=sflag, size = 0x4, scoped, tag = 'scoped memory for _feed_forward_2d.1']
    %10 = vsyncpa [#allocation3], 0
    // Predicated region
    $region2: #{_feed_forward_2d.1} parent=1 // pred_check
      _
    $region3: #{_feed_forward_2d.1} parent=1 // pred_check_branch
      %12 = sbr.rel (0) target = $region5
    $region4: #{_feed_forward_2d.1} parent=1 // pred_region
      _
    $region5: #{_feed_forward_2d.1} parent=1 // pred_fallthru
      _
    // Predicated region
    $region6: #{_feed_forward_2d.1} parent=1 // pred_check
      _
    $region7: #{_feed_forward_2d.1} parent=1 // pred_check_branch
      %14 = sbr.rel (0) target = $region9
    $region8: #{_feed_forward_2d.1} parent=1 // pred_region
      _
    $region9: #{_feed_forward_2d.1} parent=1 // pred_fallthru
      _
    // Predicated region
    $region10: #{_feed_forward_2d.1} parent=1 // pred_check
      _
    $region11: #{_feed_forward_2d.1} parent=1 // pred_check_branch
      %16 = sbr.rel (0) target = $region13
    $region12: #{_feed_forward_2d.1} parent=1 // pred_region
      _
    $region13: #{_feed_forward_2d.1} parent=1 // pred_fallthru
      _
    // Predicated region
    $region14: #{_feed_forward_2d.1} parent=1 // pred_check
      _
    $region15: #{_feed_forward_2d.1} parent=1 // pred_check_branch
      %18 = sbr.rel (0) target = $region17
    $region16: #{_feed_forward_2d.1} parent=1 // pred_region
      _
    $region17: #{_feed_forward_2d.1} parent=1 // pred_fallthru
      _
    // Predicated region
    $region18: #{_feed_forward_2d.1} parent=1 // pred_check
      _
    $region19: #{_feed_forward_2d.1} parent=1 // pred_check_branch
      %20 = sbr.rel (0) target = $region21
    $region20: #{_feed_forward_2d.1} parent=1 // pred_region
      _
    $region21: #{_feed_forward_2d.1} parent=1 // pred_fallthru
      _
    %v22 = vld [vmem:[%s0] sm:$0xf]
    %v23 = vld [vmem:[%s0 + $0x4] sm:$0xf]
    %v24 = vld [vmem:[%s1] sm:$0xf]
    %v25 = vld [vmem:[%s1 + $0x4] sm:$0xf]
    %v26 = vld [vmem:[%s1 + $0x8] sm:$0xf]
    %v27 = vld [vmem:[%s1 + $0xc] sm:$0xf]
    %v28 = vld [vmem:[%s1 + $0x10] sm:$0xf]
    %v29 = vld [vmem:[%s1 + $0x14] sm:$0xf]
    %v30 = vld [vmem:[%s1 + $0x18] sm:$0xf]
    %v31 = vld [vmem:[%s1 + $0x1c] sm:$0xf]
    %v32 = vld [vmem:[%s1 + $0x20] sm:$0xf]
    %v33 = vld [vmem:[%s1 + $0x24] sm:$0xf]
    %v34 = vld [vmem:[%s1 + $0x28] sm:$0xf]
    %v35 = vld [vmem:[%s1 + $0x2c] sm:$0xf]
    %v36 = vld [vmem:[%s1 + $0x30] sm:$0xf]
    %v37 = vld [vmem:[%s1 + $0x34] sm:$0xf]
    %v38 = vld [vmem:[%s1 + $0x38] sm:$0xf]
    %v39 = vld [vmem:[%s1 + $0x3c] sm:$0xf]
    %v40 = vld [vmem:[%s2] sm:$0x1]
    %v42 = vlaneseq
    %v43 = vshrl.u32 %v42, 7
    %v44 = vsub.s32 0, %v43
    %v45 = vrot.slane %v40, %v44
    %v49 = vunpack.c.l.b16 %v22
    %v50 = vunpack.c.l.b16 %v23
    %v51 = vpack.c.b16 %v50, %v49
    %v69 = vunpack.c.l.b16 %v24
    %v70 = vunpack.c.l.b16 %v25
    %v71 = vunpack.c.l.b16 %v26
    %v72 = vunpack.c.l.b16 %v27
    %v73 = vunpack.c.l.b16 %v28
    %v74 = vunpack.c.l.b16 %v29
    %v75 = vunpack.c.l.b16 %v30
    %v76 = vunpack.c.l.b16 %v31
    %v77 = vunpack.c.l.b16 %v32
    %v78 = vunpack.c.l.b16 %v33
    %v79 = vunpack.c.l.b16 %v34
    %v80 = vunpack.c.l.b16 %v35
    %v81 = vunpack.c.l.b16 %v36
    %v82 = vunpack.c.l.b16 %v37
    %v83 = vunpack.c.l.b16 %v38
    %v84 = vunpack.c.l.b16 %v39
    %v85 = vpack.c.b16 %v70, %v69
    %v86 = vpack.c.b16 %v72, %v71
    %v87 = vpack.c.b16 %v74, %v73
    %v88 = vpack.c.b16 %v76, %v75
    %v89 = vpack.c.b16 %v78, %v77
    %v90 = vpack.c.b16 %v80, %v79
    %v91 = vpack.c.b16 %v82, %v81
    %v92 = vpack.c.b16 %v84, %v83
    %101 = vmatprep.subr.bf16.mxu0 0
    %102 = vmatpush1.bf16.msra.mxu0 %v92
    %103 = vmatprep.subr.bf16.mxu0 0
    %104 = vmatpush1.bf16.msra.mxu0 %v91
    %105 = vmatprep.subr.bf16.mxu0 0
    %106 = vmatpush1.bf16.msra.mxu0 %v90
    %107 = vmatprep.subr.bf16.mxu0 0
    %108 = vmatpush1.bf16.msra.mxu0 %v89
    %109 = vmatprep.subr.bf16.mxu0 0
    %110 = vmatpush1.bf16.msra.mxu0 %v88
    %111 = vmatprep.subr.bf16.mxu0 0
    %112 = vmatpush1.bf16.msra.mxu0 %v87
    %113 = vmatprep.subr.bf16.mxu0 0
    %114 = vmatpush1.bf16.msra.mxu0 %v86
    %115 = vmatprep.subr.bf16.mxu0 0
    %116 = vmatpush1.bf16.msra.mxu0 %v85
    %117 = vmatprep.subr.bf16.mxu0 0
    %118 = vmatpush2.bf16.msra.mxu0 0
    %119 = vmatprep.subr.bf16.mxu0 0
    %120 = vmatpush2.bf16.msra.mxu0 0
    %121 = vmatprep.subr.bf16.mxu0 0
    %122 = vmatpush2.bf16.msra.mxu0 0
    %123 = vmatprep.subr.bf16.mxu0 0
    %124 = vmatpush2.bf16.msra.mxu0 0
    %125 = vmatprep.subr.bf16.mxu0 0
    %126 = vmatpush2.bf16.msra.mxu0 0
    %127 = vmatprep.subr.bf16.mxu0 0
    %128 = vmatpush2.bf16.msra.mxu0 0
    %129 = vmatprep.subr.bf16.mxu0 0
    %130 = vmatpush2.bf16.msra.mxu0 0
    %131 = vmatprep.subr.bf16.mxu0 0
    %132 = vmatpush2.bf16.msra.mxu0 0
    %133 = vmatprep.mubr.bf16.mxu0 0
    %134 = vmatmul.mubr.bf16.gmra.mxu0 %v51
    %v135 = vpop.f32.mrf.mxu0
    %v136 = vadd.f32 %v45, %v135
    %v137 = vpop.f32.mrf.mxu0
    %v138 = vpop.f32.mrf.mxu0
    %v139 = vadd.f32 %v45, %v138
    %v140 = vpop.f32.mrf.mxu0
    %141 = vdwg.mxu0
    %v142 = vmul.f32 %v136, 0.5
    %v143 = vmul.f32 %v139, 0.5
    %v144 = vmul.f32 %v136, 0.044715
    %v145 = vmul.f32 %v139, 0.044715
    %v146 = vmul.f32 %v144, %v136
    %v147 = vmul.f32 %v145, %v139
    %v148 = vmul.f32 %v146, %v136
    %v149 = vmul.f32 %v147, %v139
    %v150 = vadd.f32 %v136, %v148
    %v151 = vadd.f32 %v139, %v149
    %v152 = vmul.f32 %v150, 0.7978846
    %v153 = vmul.f32 %v151, 0.7978846
    %v154 = vtanh.pop %v152
    %v155 = vtanh.pop %v153
    %v156 = vadd.f32 %v154, 1.0
    %v157 = vadd.f32 %v155, 1.0
    %v158 = vmul.f32 %v142, %v156
    %v159 = vmul.f32 %v143, %v157
    %v160 = vpack.c.bf16 %v159, %v158
    %v161 = vld [vmem:[%s3] sm:$0xf]
    %v162 = vld [vmem:[%s3 + $0x4] sm:$0xf]
    %v163 = vld [vmem:[%s3 + $0x8] sm:$0xf]
    %v164 = vld [vmem:[%s3 + $0xc] sm:$0xf]
    %v165 = vld [vmem:[%s3 + $0x10] sm:$0xf]
    %v166 = vld [vmem:[%s3 + $0x14] sm:$0xf]
    %v167 = vld [vmem:[%s3 + $0x18] sm:$0xf]
    %v168 = vld [vmem:[%s3 + $0x1c] sm:$0xf]
    %v169 = vld [vmem:[%s3 + $0x20] sm:$0xf]
    %v170 = vld [vmem:[%s3 + $0x24] sm:$0xf]
    %v171 = vld [vmem:[%s3 + $0x28] sm:$0xf]
    %v172 = vld [vmem:[%s3 + $0x2c] sm:$0xf]
    %v173 = vld [vmem:[%s3 + $0x30] sm:$0xf]
    %v174 = vld [vmem:[%s3 + $0x34] sm:$0xf]
    %v175 = vld [vmem:[%s3 + $0x38] sm:$0xf]
    %v176 = vld [vmem:[%s3 + $0x3c] sm:$0xf]
    %v177 = vld [vmem:[%s4] sm:$0x1]
    %v179 = vlaneseq
    %v180 = vshrl.u32 %v179, 7
    %v181 = vsub.s32 0, %v180
    %v182 = vrot.slane %v177, %v181
    %v200 = vunpack.c.l.b16 %v161
    %v201 = vunpack.c.l.b16 %v162
    %v202 = vunpack.c.l.b16 %v163
    %v203 = vunpack.c.l.b16 %v164
    %v204 = vunpack.c.l.b16 %v165
    %v205 = vunpack.c.l.b16 %v166
    %v206 = vunpack.c.l.b16 %v167
    %v207 = vunpack.c.l.b16 %v168
    %v208 = vunpack.c.l.b16 %v169
    %v209 = vunpack.c.l.b16 %v170
    %v210 = vunpack.c.l.b16 %v171
    %v211 = vunpack.c.l.b16 %v172
    %v212 = vunpack.c.l.b16 %v173
    %v213 = vunpack.c.l.b16 %v174
    %v214 = vunpack.c.l.b16 %v175
    %v215 = vunpack.c.l.b16 %v176
    %v216 = vpack.c.b16 %v201, %v200
    %v217 = vpack.c.b16 %v203, %v202
    %v218 = vpack.c.b16 %v205, %v204
    %v219 = vpack.c.b16 %v207, %v206
    %v220 = vpack.c.b16 %v209, %v208
    %v221 = vpack.c.b16 %v211, %v210
    %v222 = vpack.c.b16 %v213, %v212
    %v223 = vpack.c.b16 %v215, %v214
    %232 = vmatprep.subr.bf16.mxu0 0
    %233 = vmatpush1.bf16.msra.mxu0 %v223
    %234 = vmatprep.subr.bf16.mxu0 0
    %235 = vmatpush1.bf16.msra.mxu0 %v222
    %236 = vmatprep.subr.bf16.mxu0 0
    %237 = vmatpush1.bf16.msra.mxu0 %v221
    %238 = vmatprep.subr.bf16.mxu0 0
    %239 = vmatpush1.bf16.msra.mxu0 %v220
    %240 = vmatprep.subr.bf16.mxu0 0
    %241 = vmatpush1.bf16.msra.mxu0 %v219
    %242 = vmatprep.subr.bf16.mxu0 0
    %243 = vmatpush1.bf16.msra.mxu0 %v218
    %244 = vmatprep.subr.bf16.mxu0 0
    %245 = vmatpush1.bf16.msra.mxu0 %v217
    %246 = vmatprep.subr.bf16.mxu0 0
    %247 = vmatpush1.bf16.msra.mxu0 %v216
    %248 = vmatprep.subr.bf16.mxu0 0
    %249 = vmatpush2.bf16.msra.mxu0 0
    %250 = vmatprep.subr.bf16.mxu0 0
    %251 = vmatpush2.bf16.msra.mxu0 0
    %252 = vmatprep.subr.bf16.mxu0 0
    %253 = vmatpush2.bf16.msra.mxu0 0
    %254 = vmatprep.subr.bf16.mxu0 0
    %255 = vmatpush2.bf16.msra.mxu0 0
    %256 = vmatprep.subr.bf16.mxu0 0
    %257 = vmatpush2.bf16.msra.mxu0 0
    %258 = vmatprep.subr.bf16.mxu0 0
    %259 = vmatpush2.bf16.msra.mxu0 0
    %260 = vmatprep.subr.bf16.mxu0 0
    %261 = vmatpush2.bf16.msra.mxu0 0
    %262 = vmatprep.subr.bf16.mxu0 0
    %263 = vmatpush2.bf16.msra.mxu0 0
    %264 = vmatprep.mubr.bf16.mxu0 0
    %265 = vmatmul.mubr.bf16.gmra.mxu0 %v160
    %v266 = vpop.f32.mrf.mxu0
    %v267 = vadd.f32 %v182, %v266
    %v268 = vpop.f32.mrf.mxu0
    %v269 = vpop.f32.mrf.mxu0
    %v270 = vadd.f32 %v182, %v269
    %v271 = vpop.f32.mrf.mxu0
    %272 = vdwg.mxu0
    %273 = vst [vmem:[#allocation2] sm:$0xff] %v267
    %274 = vst [vmem:[#allocation2 + $0x8] sm:$0xff] %v270
    // Predicated region
    $region22: #{_feed_forward_2d.1} parent=1 // pred_check
      _
    $region23: #{_feed_forward_2d.1} parent=1 // pred_check_branch
      %276 = sbr.rel (0) target = $region25
    $region24: #{_feed_forward_2d.1} parent=1 // pred_region
      %s278 = ssub.s32 256, 256
      %279 = vsyncadd [#allocation3], %s278
      %s280 = sshll.u32 [#allocation2], 4
      %s281 = int_to_ptr.vmem [resolvable:$true] %s280
      %286 = dma.vmem_to_hbm [thread:$0]  %s281, 256, %s5, [#allocation3], 128, 128, 8
    $region25: #{_feed_forward_2d.1} parent=1 // pred_fallthru
      _
    // Predicated region
    $region26: #{_feed_forward_2d.1} parent=1 // pred_check
      _
    $region27: #{_feed_forward_2d.1} parent=1 // pred_check_branch
      %288 = sbr.rel (0) target = $region29
    $region28: #{_feed_forward_2d.1} parent=1 // pred_region
      %289 = dma.done [#allocation3], 256
    $region29: #{_feed_forward_2d.1} parent=1 // pred_fallthru
      _
    %290 = vsyncpa [#allocation3], 1

</llo_original>
